<compile_context>
chip_gen: v6e
topology: v6e:2x2x1
jax: 0.10.0
libtpu: 0.0.40
codegen_flags: <defaults>
</compile_context>

<pallas_src>
import functools

import jax
import jax.numpy as jnp
from jax import lax
from jax.experimental import pallas as pl
from jax.experimental.pallas import tpu as pltpu


def _mlp_kernel(*refs, num_linear, matmul_dtype):
    """refs = (x_ref, W0, b0, W1, b1, ..., Wk, bk, outT_ref).

    x_ref:  (batch_tile, num_inputs)  -- natural layout, streamed per step
    Wi:     (out_i, in_i)             -- PyTorch nn.Linear layout, resident
    bi:     (out_i, 1)                -- column bias, broadcast along lanes
    outT:   (num_outputs, batch_tile) -- batch on lanes (lane-dense stores)
    """
    x_ref = refs[0]
    o_ref = refs[-1]
    param_refs = refs[1:-1]

    x = x_ref[...].astype(matmul_dtype)            # (tile, in0)
    w0 = param_refs[0][...].astype(matmul_dtype)   # (out0, in0)
    b0 = param_refs[1][...]                        # (out0, 1) f32
    # First layer: contract over the feature axis of both operands (== W0 @ x^T)
    # so activations are (features, batch) without a materialized transpose.
    h = lax.dot_general(w0, x, (((1,), (1,)), ((), ())),
                        preferred_element_type=jnp.float32)
    h = jnp.maximum(h + b0, 0.0)                   # f32 bias + ReLU (every layer)

    for layer in range(1, num_linear):
        w = param_refs[2 * layer][...].astype(matmul_dtype)
        b = param_refs[2 * layer + 1][...]
        h = jnp.dot(w, h.astype(matmul_dtype), preferred_element_type=jnp.float32)
        h = jnp.maximum(h + b, 0.0)

    o_ref[...] = h.astype(o_ref.dtype)


def _num_tensorcores():
    """Best-effort TensorCores-per-chip (v7x has 2; v5e/v6e have 1)."""
    try:
        info = pltpu.get_tpu_info()
        for attr in ("num_cores", "num_tensorcores", "tensorcores_per_chip",
                     "cores_per_chip", "core_count"):
            val = getattr(info, attr, None)
            if isinstance(val, int) and val > 0:
                return val
    except Exception:
        pass
    try:
        kind = str(getattr(jax.devices()[0], "device_kind", "")).lower()
        if "v7" in kind:
            return 2
    except Exception:
        pass
    return 1


def _vmem_limit_bytes(tile, dims, matmul_dtype):
    """Real footprint estimate (double-buffered streamed x/out blocks, resident
    params, a few live activation copies) with ~2x headroom plus a fixed margin
    for Mosaic-internal scratch.  No artificial floor/cap: actual usage is only
    ~1-2 MiB at tile=1024, far under every generation's VMEM."""
    f32 = 4
    mm = jnp.dtype(matmul_dtype).itemsize
    stream = 2 * f32 * tile * (dims[0] + dims[-1])
    param_bytes = 2 * 2 * f32 * sum(di * do + do
                                    for di, do in zip(dims[:-1], dims[1:]))
    acts = 4 * tile * max(dims) * (f32 + mm)
    return int(2 * (stream + param_bytes + acts) + (8 << 20))


def arrhenius_net_forward(x, params, *, batch_tile=1024,
                          matmul_dtype=jnp.bfloat16, transpose_output=True):
    """ArrheniusNet forward pass as one fused Pallas TPU kernel.

    x:      (batch, num_inputs) float32, natural PyTorch layout.
    params: list of (W, b) pairs in nn.Linear layout, W (out, in), b (out,),
            in network order (input layer, hidden..., output layer).
    Returns (batch, num_outputs) if transpose_output else (num_outputs, batch),
    equal to relu(... relu(relu(x @ W0.T + b0) @ W1.T + b1) ... @ Wk.T + bk).
    """
    B, num_inputs = x.shape
    num_outputs = params[-1][0].shape[0]
    num_linear = len(params)

    num_cores = _num_tensorcores()

    # Tile selection: one full-array block for small batches, otherwise the
    # requested tile.  Only on multi-TensorCore chips (v7x) do we force at
    # least `num_cores` grid steps (so the 'parallel' axis can shard across
    # cores); on single-TC v5e/v6e splitting would be a pure loss.
    tile = B if B <= batch_tile else batch_tile
    if num_cores > 1 and B > 256 and pl.cdiv(B, tile) < num_cores:
        tile = max(128, 128 * pl.cdiv(pl.cdiv(B, num_cores), 128))

    grid = pl.cdiv(B, tile)

    flat_params = []
    dims = [num_inputs]
    in_specs = [pl.BlockSpec((tile, num_inputs), lambda i: (i, 0))]
    for (w, b) in params:
        fan_out = w.shape[0]
        dims.append(fan_out)
        b_col = b.reshape(fan_out, 1)
        flat_params.extend([w, b_col])
        # Tiny params (<10 KiB total): full-array blocks with a constant index
        # map, so the same block stays resident in VMEM across grid steps.
        in_specs.append(pl.BlockSpec(w.shape, lambda i: (0, 0)))
        in_specs.append(pl.BlockSpec(b_col.shape, lambda i: (0, 0)))

    kernel = functools.partial(_mlp_kernel, num_linear=num_linear,
                               matmul_dtype=matmul_dtype)

    outT = pl.pallas_call(
        kernel,
        out_shape=jax.ShapeDtypeStruct((num_outputs, B), x.dtype),
        grid_spec=pltpu.PrefetchScalarGridSpec(
            num_scalar_prefetch=0,
            grid=(grid,),
            in_specs=in_specs,
            out_specs=pl.BlockSpec((num_outputs, tile), lambda i: (0, i)),
        ),
        compiler_params=pltpu.CompilerParams(
            dimension_semantics=("parallel",),
            vmem_limit_bytes=_vmem_limit_bytes(tile, dims, matmul_dtype),
        ),
    )(x, *flat_params)

    return outT.T if transpose_output else outT


def init_arrhenius_params(key, num_inputs, num_outputs, layer_sizes):
    """Deterministically initialize (W, b) pairs in PyTorch nn.Linear layout."""
    dims = [num_inputs] + list(layer_sizes) + [num_outputs]
    params = []
    for fan_in, fan_out in zip(dims[:-1], dims[1:]):
        key, kw, kb = jax.random.split(key, 3)
        bound = 1.0 / (fan_in ** 0.5)
        w = jax.random.uniform(kw, (fan_out, fan_in), jnp.float32, -bound, bound)
        b = jax.random.uniform(kb, (fan_out,), jnp.float32, -bound, bound)
        params.append((w, b))
    return params


def _reference_forward(x, params):
    h = x
    for (w, b) in params:
        h = jnp.maximum(h @ w.T + b, 0.0)
    return h


if __name__ == "__main__":
    # Shapes consistent with the module: num_inputs=16 (one-hot reactants /
    # products), num_outputs=4 (Arrhenius parameters), two hidden layers of 32.
    # batch=1000 is deliberately ragged: a single full-array block on v5e/v6e,
    # two (ragged) 512-row tiles on v7x so both TensorCores get work.
    num_inputs = 16
    num_outputs = 4
    layer_sizes = [32, 32]
    batch = 1000

    key = jax.random.PRNGKey(0)
    key, kx = jax.random.split(key)
    x = jax.random.normal(kx, (batch, num_inputs), jnp.float32)
    params = init_arrhenius_params(key, num_inputs, num_outputs, layer_sizes)

    ref = _reference_forward(x, params)

    # Default path: bf16 matmuls (MXU-native), f32 accumulation + bias/ReLU.
    out = jax.block_until_ready(arrhenius_net_forward(x, params))
    assert out.shape == (batch, num_outputs)
    assert jnp.allclose(out, ref, atol=5e-2, rtol=5e-2)

    # Exact-f32 matmul path matches the reference tightly.
    out_f32 = jax.block_until_ready(
        arrhenius_net_forward(x, params, matmul_dtype=jnp.float32))
    assert jnp.allclose(out_f32, ref, atol=1e-5, rtol=1e-5)

    # Multi-tile ragged path (forced small tile, last block partially OOB).
    out_tiled = jax.block_until_ready(
        arrhenius_net_forward(x, params, batch_tile=256,
                              matmul_dtype=jnp.float32))
    assert jnp.allclose(out_tiled, ref, atol=1e-5, rtol=1e-5)

    # Tiny batch: single full-array block, no padding.
    out_small = jax.block_until_ready(arrhenius_net_forward(x[:7], params))
    assert out_small.shape == (7, num_outputs)
    assert jnp.allclose(out_small, ref[:7], atol=5e-2, rtol=5e-2)

    # Kernel-native transposed output layout (skips the wrapper-side .T).
    outT = jax.block_until_ready(
        arrhenius_net_forward(x, params, transpose_output=False))
    assert outT.shape == (num_outputs, batch)
    assert jnp.allclose(outT.T, ref, atol=5e-2, rtol=5e-2)

    print("KERNEL_OK")
</pallas_src>

<mosaic_0001>
module attributes {stable_mosaic.version = 11 : i64} {
  func.func @_mlp_kernel(%arg0: i32, %arg1: memref<1000x16xf32, #tpu.memory_space<vmem>>, %arg2: memref<32x16xf32, #tpu.memory_space<vmem>>, %arg3: memref<32x1xf32, #tpu.memory_space<vmem>>, %arg4: memref<32x32xf32, #tpu.memory_space<vmem>>, %arg5: memref<32x1xf32, #tpu.memory_space<vmem>>, %arg6: memref<4x32xf32, #tpu.memory_space<vmem>>, %arg7: memref<4x1xf32, #tpu.memory_space<vmem>>, %arg8: memref<4x1000xf32, #tpu.memory_space<vmem>>) attributes {dimension_semantics = [#tpu.dimension_semantics<parallel>], iteration_bounds = array<i64: 1>, scalar_prefetch = 0 : i64, scratch_operands = 0 : i64, tpu.core_type = #tpu.core_type<tc>, window_params = [{transform_indices = @transform_0, window_bounds = array<i64: 1000, 16>}, {pipeline_mode = #tpu.pipeline_mode<synchronous>, transform_indices = @transform_1, window_bounds = array<i64: 32, 16>}, {pipeline_mode = #tpu.pipeline_mode<synchronous>, transform_indices = @transform_2, window_bounds = array<i64: 32, 1>}, {pipeline_mode = #tpu.pipeline_mode<synchronous>, transform_indices = @transform_3, window_bounds = array<i64: 32, 32>}, {pipeline_mode = #tpu.pipeline_mode<synchronous>, transform_indices = @transform_4, window_bounds = array<i64: 32, 1>}, {pipeline_mode = #tpu.pipeline_mode<synchronous>, transform_indices = @transform_5, window_bounds = array<i64: 4, 32>}, {pipeline_mode = #tpu.pipeline_mode<synchronous>, transform_indices = @transform_6, window_bounds = array<i64: 4, 1>}, {transform_indices = @transform_7, window_bounds = array<i64: 4, 1000>}]} {
    %c0 = arith.constant 0 : index
    %c0_0 = arith.constant 0 : index
    %0 = vector.load %arg1[%c0, %c0_0] : memref<1000x16xf32, #tpu.memory_space<vmem>>, vector<1000x16xf32>
    %1 = arith.truncf %0 : vector<1000x16xf32> to vector<1000x16xbf16>
    %c0_1 = arith.constant 0 : index
    %c0_2 = arith.constant 0 : index
    %2 = vector.load %arg2[%c0_1, %c0_2] : memref<32x16xf32, #tpu.memory_space<vmem>>, vector<32x16xf32>
    %3 = arith.truncf %2 : vector<32x16xf32> to vector<32x16xbf16>
    %c0_3 = arith.constant 0 : index
    %c0_4 = arith.constant 0 : index
    %4 = vector.load %arg3[%c0_3, %c0_4] : memref<32x1xf32, #tpu.memory_space<vmem>>, vector<32x1xf32>
    %cst = arith.constant dense<0.000000e+00> : vector<32x1000xf32>
    %5 = tpu.matmul %3, %1, %cst {dimension_numbers = #tpu.dot_dimension_numbers<[1], [1], [0], [0], [0, 0, 1, 0], [], []>} : vector<32x16xbf16>, vector<1000x16xbf16>, vector<32x1000xf32> -> vector<32x1000xf32>
    %6 = vector.broadcast %4 : vector<32x1xf32> to vector<32x1000xf32>
    %7 = arith.addf %5, %6 : vector<32x1000xf32>
    %cst_5 = arith.constant 0.000000e+00 : f32
    %8 = vector.broadcast %cst_5 : f32 to vector<32x1000xf32>
    %9 = arith.maximumf %7, %8 : vector<32x1000xf32>
    %c0_6 = arith.constant 0 : index
    %c0_7 = arith.constant 0 : index
    %10 = vector.load %arg4[%c0_6, %c0_7] : memref<32x32xf32, #tpu.memory_space<vmem>>, vector<32x32xf32>
    %11 = arith.truncf %10 : vector<32x32xf32> to vector<32x32xbf16>
    %c0_8 = arith.constant 0 : index
    %c0_9 = arith.constant 0 : index
    %12 = vector.load %arg5[%c0_8, %c0_9] : memref<32x1xf32, #tpu.memory_space<vmem>>, vector<32x1xf32>
    %13 = arith.truncf %9 : vector<32x1000xf32> to vector<32x1000xbf16>
    %cst_10 = arith.constant dense<0.000000e+00> : vector<32x1000xf32>
    %14 = tpu.matmul %11, %13, %cst_10 {dimension_numbers = #tpu.dot_dimension_numbers<[1], [0], [0], [1], [0, 0, 1, 1], [], []>} : vector<32x32xbf16>, vector<32x1000xbf16>, vector<32x1000xf32> -> vector<32x1000xf32>
    %15 = vector.broadcast %12 : vector<32x1xf32> to vector<32x1000xf32>
    %16 = arith.addf %14, %15 : vector<32x1000xf32>
    %cst_11 = arith.constant 0.000000e+00 : f32
    %17 = vector.broadcast %cst_11 : f32 to vector<32x1000xf32>
    %18 = arith.maximumf %16, %17 : vector<32x1000xf32>
    %c0_12 = arith.constant 0 : index
    %c0_13 = arith.constant 0 : index
    %19 = vector.load %arg6[%c0_12, %c0_13] : memref<4x32xf32, #tpu.memory_space<vmem>>, vector<4x32xf32>
    %20 = arith.truncf %19 : vector<4x32xf32> to vector<4x32xbf16>
    %c0_14 = arith.constant 0 : index
    %c0_15 = arith.constant 0 : index
    %21 = vector.load %arg7[%c0_14, %c0_15] : memref<4x1xf32, #tpu.memory_space<vmem>>, vector<4x1xf32>
    %22 = arith.truncf %18 : vector<32x1000xf32> to vector<32x1000xbf16>
    %cst_16 = arith.constant dense<0.000000e+00> : vector<4x1000xf32>
    %23 = tpu.matmul %20, %22, %cst_16 {dimension_numbers = #tpu.dot_dimension_numbers<[1], [0], [0], [1], [0, 0, 1, 1], [], []>} : vector<4x32xbf16>, vector<32x1000xbf16>, vector<4x1000xf32> -> vector<4x1000xf32>
    %24 = vector.broadcast %21 : vector<4x1xf32> to vector<4x1000xf32>
    %25 = arith.addf %23, %24 : vector<4x1000xf32>
    %cst_17 = arith.constant 0.000000e+00 : f32
    %26 = vector.broadcast %cst_17 : f32 to vector<4x1000xf32>
    %27 = arith.maximumf %25, %26 : vector<4x1000xf32>
    %c0_18 = arith.constant 0 : index
    %c0_19 = arith.constant 0 : index
    %28 = vector.load %arg8[%c0_18, %c0_19] : memref<4x1000xf32, #tpu.memory_space<vmem>>, vector<4x1000xf32>
    tpu.vector_store %arg8[%c0_18, %c0_19], %27 {strides = array<i32>} : memref<4x1000xf32, #tpu.memory_space<vmem>>, vector<4x1000xf32>,
    return
  }
  func.func @transform_0(%arg0: i32) -> (i32, i32) {
    %c0_i32 = arith.constant 0 : i32
    %c0_i32_0 = arith.constant 0 : i32
    return %arg0, %c0_i32 : i32, i32
  }
  func.func @transform_1(%arg0: i32) -> (i32, i32) {
    %c0_i32 = arith.constant 0 : i32
    %c0_i32_0 = arith.constant 0 : i32
    %c0_i32_1 = arith.constant 0 : i32
    return %c0_i32, %c0_i32_0 : i32, i32
  }
  func.func @transform_2(%arg0: i32) -> (i32, i32) {
    %c0_i32 = arith.constant 0 : i32
    %c0_i32_0 = arith.constant 0 : i32
    %c0_i32_1 = arith.constant 0 : i32
    return %c0_i32, %c0_i32_0 : i32, i32
  }
  func.func @transform_3(%arg0: i32) -> (i32, i32) {
    %c0_i32 = arith.constant 0 : i32
    %c0_i32_0 = arith.constant 0 : i32
    %c0_i32_1 = arith.constant 0 : i32
    return %c0_i32, %c0_i32_0 : i32, i32
  }
  func.func @transform_4(%arg0: i32) -> (i32, i32) {
    %c0_i32 = arith.constant 0 : i32
    %c0_i32_0 = arith.constant 0 : i32
    %c0_i32_1 = arith.constant 0 : i32
    return %c0_i32, %c0_i32_0 : i32, i32
  }
  func.func @transform_5(%arg0: i32) -> (i32, i32) {
    %c0_i32 = arith.constant 0 : i32
    %c0_i32_0 = arith.constant 0 : i32
    %c0_i32_1 = arith.constant 0 : i32
    return %c0_i32, %c0_i32_0 : i32, i32
  }
  func.func @transform_6(%arg0: i32) -> (i32, i32) {
    %c0_i32 = arith.constant 0 : i32
    %c0_i32_0 = arith.constant 0 : i32
    %c0_i32_1 = arith.constant 0 : i32
    return %c0_i32, %c0_i32_0 : i32, i32
  }
  func.func @transform_7(%arg0: i32) -> (i32, i32) {
    %c0_i32 = arith.constant 0 : i32
    %c0_i32_0 = arith.constant 0 : i32
    return %c0_i32, %arg0 : i32, i32
  }
}

</mosaic_0001>

<llo_original>
// kernel: tpu_custom_call.1
$region0: #{tpu_custom_call.1}
  #allocation0 [shape = 'u32[]', space=smem, size = 0x4, offset = 0x4, fixed_abs, tag = 'smem constant byte address 0x4 - core index']
  #allocation1 [shape = 'u32[144,128]{1,0:T(1,128)}', space=vmem, size = 0x12000, scoped, tag = 'internal scratch']
  %s0 = inlined_call_operand.vmem [shape: f32[1000,16], index: 0, kind: input, shape index: {}]
  %s1 = inlined_call_operand.vmem [shape: f32[32,16], index: 1, kind: input, shape index: {}]
  %s2 = inlined_call_operand.vmem [shape: f32[32,1], index: 2, kind: input, shape index: {}]
  %s3 = inlined_call_operand.vmem [shape: f32[32,32], index: 3, kind: input, shape index: {}]
  %s4 = inlined_call_operand.vmem [shape: f32[32,1], index: 4, kind: input, shape index: {}]
  %s5 = inlined_call_operand.vmem [shape: f32[4,32], index: 5, kind: input, shape index: {}]
  %s6 = inlined_call_operand.vmem [shape: f32[4,1], index: 6, kind: input, shape index: {}]
  %s7 = inlined_call_operand.hbm [shape: f32[4,1000], index: 7, kind: output, shape index: {}]
  %s8 = sld [smem:[#allocation0]]
  $region38: #{tpu_custom_call.1} parent=0
    _
  %s10 = ssub.s32 1, %s8
  %s11 = scalar_select 0, %s10, %s8
  $region1: #{tpu_custom_call.1} parent=0
    #allocation2 [shape = 'u8[16384]{0}', space=vmem, size = 0x4000, scoped, tag = 'output window, operand 0, single buffered']
    #allocation3 [shape = 's32[1]{0}', space=sflag, size = 0x4, scoped, tag = 'scoped memory for tpu_custom_call.1']
    %12 = vsyncpa [#allocation3], 0
    // Predicated region
    $region2: #{tpu_custom_call.1} parent=1 // pred_check
      _
    $region3: #{tpu_custom_call.1} parent=1 // pred_check_branch
      %14 = sbr.rel (0) target = $region5
    $region4: #{tpu_custom_call.1} parent=1 // pred_region
      _
    $region5: #{tpu_custom_call.1} parent=1 // pred_fallthru
      _
    // Predicated region
    $region6: #{tpu_custom_call.1} parent=1 // pred_check
      _
    $region7: #{tpu_custom_call.1} parent=1 // pred_check_branch
      %16 = sbr.rel (0) target = $region9
    $region8: #{tpu_custom_call.1} parent=1 // pred_region
      _
    $region9: #{tpu_custom_call.1} parent=1 // pred_fallthru
      _
    // Predicated region
    $region10: #{tpu_custom_call.1} parent=1 // pred_check
      _
    $region11: #{tpu_custom_call.1} parent=1 // pred_check_branch
      %18 = sbr.rel (0) target = $region13
    $region12: #{tpu_custom_call.1} parent=1 // pred_region
      _
    $region13: #{tpu_custom_call.1} parent=1 // pred_fallthru
      _
    // Predicated region
    $region14: #{tpu_custom_call.1} parent=1 // pred_check
      _
    $region15: #{tpu_custom_call.1} parent=1 // pred_check_branch
      %20 = sbr.rel (0) target = $region17
    $region16: #{tpu_custom_call.1} parent=1 // pred_region
      _
    $region17: #{tpu_custom_call.1} parent=1 // pred_fallthru
      _
    // Predicated region
    $region18: #{tpu_custom_call.1} parent=1 // pred_check
      _
    $region19: #{tpu_custom_call.1} parent=1 // pred_check_branch
      %22 = sbr.rel (0) target = $region21
    $region20: #{tpu_custom_call.1} parent=1 // pred_region
      _
    $region21: #{tpu_custom_call.1} parent=1 // pred_fallthru
      _
    // Predicated region
    $region22: #{tpu_custom_call.1} parent=1 // pred_check
      _
    $region23: #{tpu_custom_call.1} parent=1 // pred_check_branch
      %24 = sbr.rel (0) target = $region25
    $region24: #{tpu_custom_call.1} parent=1 // pred_region
      _
    $region25: #{tpu_custom_call.1} parent=1 // pred_fallthru
      _
    // Predicated region
    $region26: #{tpu_custom_call.1} parent=1 // pred_check
      _
    $region27: #{tpu_custom_call.1} parent=1 // pred_check_branch
      %26 = sbr.rel (0) target = $region29
    $region28: #{tpu_custom_call.1} parent=1 // pred_region
      _
    $region29: #{tpu_custom_call.1} parent=1 // pred_fallthru
      _
    %v28 = vld [vmem:[%s0] sm:$0xff]
    %v29 = vld [vmem:[%s0 + $0x8] sm:$0xff]
    %v30 = vld [vmem:[%s0 + $0x10] sm:$0xff]
    %v31 = vld [vmem:[%s0 + $0x18] sm:$0xff]
    %v32 = vld [vmem:[%s0 + $0x20] sm:$0xff]
    %v33 = vld [vmem:[%s0 + $0x28] sm:$0xff]
    %v34 = vld [vmem:[%s0 + $0x30] sm:$0xff]
    %v35 = vld [vmem:[%s0 + $0x38] sm:$0xff]
    %v36 = vld [vmem:[%s0 + $0x40] sm:$0xff]
    %v37 = vld [vmem:[%s0 + $0x48] sm:$0xff]
    %v38 = vld [vmem:[%s0 + $0x50] sm:$0xff]
    %v39 = vld [vmem:[%s0 + $0x58] sm:$0xff]
    %v40 = vld [vmem:[%s0 + $0x60] sm:$0xff]
    %v41 = vld [vmem:[%s0 + $0x68] sm:$0xff]
    %v42 = vld [vmem:[%s0 + $0x70] sm:$0xff]
    %v43 = vld [vmem:[%s0 + $0x78] sm:$0xff]
    %v44 = vld [vmem:[%s0 + $0x80] sm:$0xff]
    %v45 = vld [vmem:[%s0 + $0x88] sm:$0xff]
    %v46 = vld [vmem:[%s0 + $0x90] sm:$0xff]
    %v47 = vld [vmem:[%s0 + $0x98] sm:$0xff]
    %v48 = vld [vmem:[%s0 + $0xa0] sm:$0xff]
    %v49 = vld [vmem:[%s0 + $0xa8] sm:$0xff]
    %v50 = vld [vmem:[%s0 + $0xb0] sm:$0xff]
    %v51 = vld [vmem:[%s0 + $0xb8] sm:$0xff]
    %v52 = vld [vmem:[%s0 + $0xc0] sm:$0xff]
    %v53 = vld [vmem:[%s0 + $0xc8] sm:$0xff]
    %v54 = vld [vmem:[%s0 + $0xd0] sm:$0xff]
    %v55 = vld [vmem:[%s0 + $0xd8] sm:$0xff]
    %v56 = vld [vmem:[%s0 + $0xe0] sm:$0xff]
    %v57 = vld [vmem:[%s0 + $0xe8] sm:$0xff]
    %v58 = vld [vmem:[%s0 + $0xf0] sm:$0xff]
    %v59 = vld [vmem:[%s0 + $0xf8] sm:$0xff]
    %v60 = vld [vmem:[%s0 + $0x100] sm:$0xff]
    %v61 = vld [vmem:[%s0 + $0x108] sm:$0xff]
    %v62 = vld [vmem:[%s0 + $0x110] sm:$0xff]
    %v63 = vld [vmem:[%s0 + $0x118] sm:$0xff]
    %v64 = vld [vmem:[%s0 + $0x120] sm:$0xff]
    %v65 = vld [vmem:[%s0 + $0x128] sm:$0xff]
    %v66 = vld [vmem:[%s0 + $0x130] sm:$0xff]
    %v67 = vld [vmem:[%s0 + $0x138] sm:$0xff]
    %v68 = vld [vmem:[%s0 + $0x140] sm:$0xff]
    %v69 = vld [vmem:[%s0 + $0x148] sm:$0xff]
    %v70 = vld [vmem:[%s0 + $0x150] sm:$0xff]
    %v71 = vld [vmem:[%s0 + $0x158] sm:$0xff]
    %v72 = vld [vmem:[%s0 + $0x160] sm:$0xff]
    %v73 = vld [vmem:[%s0 + $0x168] sm:$0xff]
    %v74 = vld [vmem:[%s0 + $0x170] sm:$0xff]
    %v75 = vld [vmem:[%s0 + $0x178] sm:$0xff]
    %v76 = vld [vmem:[%s0 + $0x180] sm:$0xff]
    %v77 = vld [vmem:[%s0 + $0x188] sm:$0xff]
    %v78 = vld [vmem:[%s0 + $0x190] sm:$0xff]
    %v79 = vld [vmem:[%s0 + $0x198] sm:$0xff]
    %v80 = vld [vmem:[%s0 + $0x1a0] sm:$0xff]
    %v81 = vld [vmem:[%s0 + $0x1a8] sm:$0xff]
    %v82 = vld [vmem:[%s0 + $0x1b0] sm:$0xff]
    %v83 = vld [vmem:[%s0 + $0x1b8] sm:$0xff]
    %v84 = vld [vmem:[%s0 + $0x1c0] sm:$0xff]
    %v85 = vld [vmem:[%s0 + $0x1c8] sm:$0xff]
    %v86 = vld [vmem:[%s0 + $0x1d0] sm:$0xff]
    %v87 = vld [vmem:[%s0 + $0x1d8] sm:$0xff]
    %v88 = vld [vmem:[%s0 + $0x1e0] sm:$0xff]
    %v89 = vld [vmem:[%s0 + $0x1e8] sm:$0xff]
    %v90 = vld [vmem:[%s0 + $0x1f0] sm:$0xff]
    %v91 = vld [vmem:[%s0 + $0x1f8] sm:$0xff]
    %v92 = vld [vmem:[%s0 + $0x200] sm:$0xff]
    %v93 = vld [vmem:[%s0 + $0x208] sm:$0xff]
    %v94 = vld [vmem:[%s0 + $0x210] sm:$0xff]
    %v95 = vld [vmem:[%s0 + $0x218] sm:$0xff]
    %v96 = vld [vmem:[%s0 + $0x220] sm:$0xff]
    %v97 = vld [vmem:[%s0 + $0x228] sm:$0xff]
    %v98 = vld [vmem:[%s0 + $0x230] sm:$0xff]
    %v99 = vld [vmem:[%s0 + $0x238] sm:$0xff]
    %v100 = vld [vmem:[%s0 + $0x240] sm:$0xff]
    %v101 = vld [vmem:[%s0 + $0x248] sm:$0xff]
    %v102 = vld [vmem:[%s0 + $0x250] sm:$0xff]
    %v103 = vld [vmem:[%s0 + $0x258] sm:$0xff]
    %v104 = vld [vmem:[%s0 + $0x260] sm:$0xff]
    %v105 = vld [vmem:[%s0 + $0x268] sm:$0xff]
    %v106 = vld [vmem:[%s0 + $0x270] sm:$0xff]
    %v107 = vld [vmem:[%s0 + $0x278] sm:$0xff]
    %v108 = vld [vmem:[%s0 + $0x280] sm:$0xff]
    %v109 = vld [vmem:[%s0 + $0x288] sm:$0xff]
    %v110 = vld [vmem:[%s0 + $0x290] sm:$0xff]
    %v111 = vld [vmem:[%s0 + $0x298] sm:$0xff]
    %v112 = vld [vmem:[%s0 + $0x2a0] sm:$0xff]
    %v113 = vld [vmem:[%s0 + $0x2a8] sm:$0xff]
    %v114 = vld [vmem:[%s0 + $0x2b0] sm:$0xff]
    %v115 = vld [vmem:[%s0 + $0x2b8] sm:$0xff]
    %v116 = vld [vmem:[%s0 + $0x2c0] sm:$0xff]
    %v117 = vld [vmem:[%s0 + $0x2c8] sm:$0xff]
    %v118 = vld [vmem:[%s0 + $0x2d0] sm:$0xff]
    %v119 = vld [vmem:[%s0 + $0x2d8] sm:$0xff]
    %v120 = vld [vmem:[%s0 + $0x2e0] sm:$0xff]
    %v121 = vld [vmem:[%s0 + $0x2e8] sm:$0xff]
    %v122 = vld [vmem:[%s0 + $0x2f0] sm:$0xff]
    %v123 = vld [vmem:[%s0 + $0x2f8] sm:$0xff]
    %v124 = vld [vmem:[%s0 + $0x300] sm:$0xff]
    %v125 = vld [vmem:[%s0 + $0x308] sm:$0xff]
    %v126 = vld [vmem:[%s0 + $0x310] sm:$0xff]
    %v127 = vld [vmem:[%s0 + $0x318] sm:$0xff]
    %v128 = vld [vmem:[%s0 + $0x320] sm:$0xff]
    %v129 = vld [vmem:[%s0 + $0x328] sm:$0xff]
    %v130 = vld [vmem:[%s0 + $0x330] sm:$0xff]
    %v131 = vld [vmem:[%s0 + $0x338] sm:$0xff]
    %v132 = vld [vmem:[%s0 + $0x340] sm:$0xff]
    %v133 = vld [vmem:[%s0 + $0x348] sm:$0xff]
    %v134 = vld [vmem:[%s0 + $0x350] sm:$0xff]
    %v135 = vld [vmem:[%s0 + $0x358] sm:$0xff]
    %v136 = vld [vmem:[%s0 + $0x360] sm:$0xff]
    %v137 = vld [vmem:[%s0 + $0x368] sm:$0xff]
    %v138 = vld [vmem:[%s0 + $0x370] sm:$0xff]
    %v139 = vld [vmem:[%s0 + $0x378] sm:$0xff]
    %v140 = vld [vmem:[%s0 + $0x380] sm:$0xff]
    %v141 = vld [vmem:[%s0 + $0x388] sm:$0xff]
    %v142 = vld [vmem:[%s0 + $0x390] sm:$0xff]
    %v143 = vld [vmem:[%s0 + $0x398] sm:$0xff]
    %v144 = vld [vmem:[%s0 + $0x3a0] sm:$0xff]
    %v145 = vld [vmem:[%s0 + $0x3a8] sm:$0xff]
    %v146 = vld [vmem:[%s0 + $0x3b0] sm:$0xff]
    %v147 = vld [vmem:[%s0 + $0x3b8] sm:$0xff]
    %v148 = vld [vmem:[%s0 + $0x3c0] sm:$0xff]
    %v149 = vld [vmem:[%s0 + $0x3c8] sm:$0xff]
    %v150 = vld [vmem:[%s0 + $0x3d0] sm:$0xff]
    %v151 = vld [vmem:[%s0 + $0x3d8] sm:$0xff]
    %v152 = vld [vmem:[%s0 + $0x3e0] sm:$0xff]
    %v153 = vpack.c.bf16 %v29, %v28
    %v154 = vpack.c.bf16 %v31, %v30
    %v155 = vpack.c.bf16 %v33, %v32
    %v156 = vpack.c.bf16 %v35, %v34
    %v157 = vpack.c.bf16 %v37, %v36
    %v158 = vpack.c.bf16 %v39, %v38
    %v159 = vpack.c.bf16 %v41, %v40
    %v160 = vpack.c.bf16 %v43, %v42
    %v161 = vpack.c.bf16 %v45, %v44
    %v162 = vpack.c.bf16 %v47, %v46
    %v163 = vpack.c.bf16 %v49, %v48
    %v164 = vpack.c.bf16 %v51, %v50
    %v165 = vpack.c.bf16 %v53, %v52
    %v166 = vpack.c.bf16 %v55, %v54
    %v167 = vpack.c.bf16 %v57, %v56
    %v168 = vpack.c.bf16 %v59, %v58
    %v169 = vpack.c.bf16 %v61, %v60
    %v170 = vpack.c.bf16 %v63, %v62
    %v171 = vpack.c.bf16 %v65, %v64
    %v172 = vpack.c.bf16 %v67, %v66
    %v173 = vpack.c.bf16 %v69, %v68
    %v174 = vpack.c.bf16 %v71, %v70
    %v175 = vpack.c.bf16 %v73, %v72
    %v176 = vpack.c.bf16 %v75, %v74
    %v177 = vpack.c.bf16 %v77, %v76
    %v178 = vpack.c.bf16 %v79, %v78
    %v179 = vpack.c.bf16 %v81, %v80
    %v180 = vpack.c.bf16 %v83, %v82
    %v181 = vpack.c.bf16 %v85, %v84
    %v182 = vpack.c.bf16 %v87, %v86
    %v183 = vpack.c.bf16 %v89, %v88
    %v184 = vpack.c.bf16 %v91, %v90
    %v185 = vpack.c.bf16 %v93, %v92
    %v186 = vpack.c.bf16 %v95, %v94
    %v187 = vpack.c.bf16 %v97, %v96
    %v188 = vpack.c.bf16 %v99, %v98
    %v189 = vpack.c.bf16 %v101, %v100
    %v190 = vpack.c.bf16 %v103, %v102
    %v191 = vpack.c.bf16 %v105, %v104
    %v192 = vpack.c.bf16 %v107, %v106
    %v193 = vpack.c.bf16 %v109, %v108
    %v194 = vpack.c.bf16 %v111, %v110
    %v195 = vpack.c.bf16 %v113, %v112
    %v196 = vpack.c.bf16 %v115, %v114
    %v197 = vpack.c.bf16 %v117, %v116
    %v198 = vpack.c.bf16 %v119, %v118
    %v199 = vpack.c.bf16 %v121, %v120
    %v200 = vpack.c.bf16 %v123, %v122
    %v201 = vpack.c.bf16 %v125, %v124
    %v202 = vpack.c.bf16 %v127, %v126
    %v203 = vpack.c.bf16 %v129, %v128
    %v204 = vpack.c.bf16 %v131, %v130
    %v205 = vpack.c.bf16 %v133, %v132
    %v206 = vpack.c.bf16 %v135, %v134
    %v207 = vpack.c.bf16 %v137, %v136
    %v208 = vpack.c.bf16 %v139, %v138
    %v209 = vpack.c.bf16 %v141, %v140
    %v210 = vpack.c.bf16 %v143, %v142
    %v211 = vpack.c.bf16 %v145, %v144
    %v212 = vpack.c.bf16 %v147, %v146
    %v213 = vpack.c.bf16 %v149, %v148
    %v214 = vpack.c.bf16 %v151, %v150
    %v215 = vpack.c.bf16 %v152, %v152
    %v216 = vld [vmem:[%s1] sm:$0xff]
    %v217 = vld [vmem:[%s1 + $0x8] sm:$0xff]
    %v218 = vld [vmem:[%s1 + $0x10] sm:$0xff]
    %v219 = vld [vmem:[%s1 + $0x18] sm:$0xff]
    %v220 = vpack.c.bf16 %v217, %v216
    %v221 = vpack.c.bf16 %v219, %v218
    %v222 = vld [vmem:[%s2] sm:$0xff]
    %v223 = vld [vmem:[%s2 + $0x8] sm:$0xff]
    %v224 = vld [vmem:[%s2 + $0x10] sm:$0xff]
    %v225 = vld [vmem:[%s2 + $0x18] sm:$0xff]
    %227 = vset.pattern.permute.xlu0 0
    %228 = vperm.xlu0 %227, %v222
    %v229 = vpop.permute.xlu0 %228
    %232 = vset.pattern.permute.xlu0 0
    %233 = vperm.xlu0 %232, %v223
    %v234 = vpop.permute.xlu0 %233
    %237 = vset.pattern.permute.xlu0 0
    %238 = vperm.xlu0 %237, %v224
    %v239 = vpop.permute.xlu0 %238
    %242 = vset.pattern.permute.xlu0 0
    %243 = vperm.xlu0 %242, %v225
    %v244 = vpop.permute.xlu0 %243
    %vm246 = vcmask 130048
    %v248 = vsel %vm246, %v220, 0
    %v251 = vsel %vm246, %v221, 0
    %v254 = vsel %vm246, %v153, 0
    %v257 = vsel %vm246, %v154, 0
    %v260 = vsel %vm246, %v155, 0
    %v263 = vsel %vm246, %v156, 0
    %v266 = vsel %vm246, %v157, 0
    %v269 = vsel %vm246, %v158, 0
    %v272 = vsel %vm246, %v159, 0
    %v275 = vsel %vm246, %v160, 0
    %v278 = vsel %vm246, %v161, 0
    %v281 = vsel %vm246, %v162, 0
    %v284 = vsel %vm246, %v163, 0
    %v287 = vsel %vm246, %v164, 0
    %v290 = vsel %vm246, %v165, 0
    %v293 = vsel %vm246, %v166, 0
    %v296 = vsel %vm246, %v167, 0
    %v299 = vsel %vm246, %v168, 0
    %v302 = vsel %vm246, %v169, 0
    %v305 = vsel %vm246, %v170, 0
    %v308 = vsel %vm246, %v171, 0
    %v311 = vsel %vm246, %v172, 0
    %v314 = vsel %vm246, %v173, 0
    %v317 = vsel %vm246, %v174, 0
    %v320 = vsel %vm246, %v175, 0
    %v323 = vsel %vm246, %v176, 0
    %v326 = vsel %vm246, %v177, 0
    %v329 = vsel %vm246, %v178, 0
    %v332 = vsel %vm246, %v179, 0
    %v335 = vsel %vm246, %v180, 0
    %v338 = vsel %vm246, %v181, 0
    %v341 = vsel %vm246, %v182, 0
    %v344 = vsel %vm246, %v183, 0
    %v347 = vsel %vm246, %v184, 0
    %v350 = vsel %vm246, %v185, 0
    %v353 = vsel %vm246, %v186, 0
    %v356 = vsel %vm246, %v187, 0
    %v359 = vsel %vm246, %v188, 0
    %v362 = vsel %vm246, %v189, 0
    %v365 = vsel %vm246, %v190, 0
    %v368 = vsel %vm246, %v191, 0
    %v371 = vsel %vm246, %v192, 0
    %v374 = vsel %vm246, %v193, 0
    %v377 = vsel %vm246, %v194, 0
    %v380 = vsel %vm246, %v195, 0
    %v383 = vsel %vm246, %v196, 0
    %v386 = vsel %vm246, %v197, 0
    %v389 = vsel %vm246, %v198, 0
    %v392 = vsel %vm246, %v199, 0
    %v395 = vsel %vm246, %v200, 0
    %v398 = vsel %vm246, %v201, 0
    %v401 = vsel %vm246, %v202, 0
    %v404 = vsel %vm246, %v203, 0
    %v407 = vsel %vm246, %v204, 0
    %v410 = vsel %vm246, %v205, 0
    %v413 = vsel %vm246, %v206, 0
    %v416 = vsel %vm246, %v207, 0
    %v419 = vsel %vm246, %v208, 0
    %v422 = vsel %vm246, %v209, 0
    %v425 = vsel %vm246, %v210, 0
    %v428 = vsel %vm246, %v211, 0
    %v431 = vsel %vm246, %v212, 0
    %v434 = vsel %vm246, %v213, 0
    %v437 = vsel %vm246, %v214, 0
    %v440 = vsel %vm246, %v215, 0
    %442 = vmatprep.subr.bf16.mxu0 0
    %443 = vmatpush1.bf16.xpose.msra.mxu0 %v275
    %444 = vmatprep.subr.bf16.mxu0 0
    %445 = vmatpush1.bf16.xpose.msra.mxu0 %v272
    %446 = vmatprep.subr.bf16.mxu0 0
    %447 = vmatpush1.bf16.xpose.msra.mxu0 %v269
    %448 = vmatprep.subr.bf16.mxu0 0
    %449 = vmatpush1.bf16.xpose.msra.mxu0 %v266
    %450 = vmatprep.subr.bf16.mxu0 0
    %451 = vmatpush1.bf16.xpose.msra.mxu0 %v263
    %452 = vmatprep.subr.bf16.mxu0 0
    %453 = vmatpush1.bf16.xpose.msra.mxu0 %v260
    %454 = vmatprep.subr.bf16.mxu0 0
    %455 = vmatpush1.bf16.xpose.msra.mxu0 %v257
    %456 = vmatprep.subr.bf16.mxu0 0
    %457 = vmatpush1.bf16.xpose.msra.mxu0 %v254
    %458 = vmatprep.subr.bf16.mxu0 0
    %459 = vmatpush2.bf16.xpose.msra.mxu0 %v299
    %460 = vmatprep.subr.bf16.mxu0 0
    %461 = vmatpush2.bf16.xpose.msra.mxu0 %v296
    %462 = vmatprep.subr.bf16.mxu0 0
    %463 = vmatpush2.bf16.xpose.msra.mxu0 %v293
    %464 = vmatprep.subr.bf16.mxu0 0
    %465 = vmatpush2.bf16.xpose.msra.mxu0 %v290
    %466 = vmatprep.subr.bf16.mxu0 0
    %467 = vmatpush2.bf16.xpose.msra.mxu0 %v287
    %468 = vmatprep.subr.bf16.mxu0 0
    %469 = vmatpush2.bf16.xpose.msra.mxu0 %v284
    %470 = vmatprep.subr.bf16.mxu0 0
    %471 = vmatpush2.bf16.xpose.msra.mxu0 %v281
    %472 = vmatprep.subr.bf16.mxu0 0
    %473 = vmatpush2.bf16.xpose.msra.mxu0 %v278
    %474 = vmatprep.mubr.bf16.mxu0 0
    %475 = vmatmul.mubr.bf16.gmra.mxu0 %v248
    %v476 = vpop.f32.mrf.mxu0
    %v477 = vadd.f32 %v229, %v476
    %v478 = vpop.f32.mrf.mxu0
    %v479 = vadd.f32 %v229, %v478
    %v480 = vpop.f32.mrf.mxu0
    %v481 = vadd.f32 %v234, %v480
    %v482 = vpop.f32.mrf.mxu0
    %v483 = vadd.f32 %v234, %v482
    %484 = vmatprep.mubr.bf16.mxu0 0
    %485 = vmatmul.mubr.bf16.gmra.mxu0 %v251
    %v486 = vpop.f32.mrf.mxu0
    %v487 = vadd.f32 %v239, %v486
    %v488 = vpop.f32.mrf.mxu0
    %v489 = vadd.f32 %v239, %v488
    %v490 = vpop.f32.mrf.mxu0
    %v491 = vadd.f32 %v244, %v490
    %v492 = vpop.f32.mrf.mxu0
    %v493 = vadd.f32 %v244, %v492
    %494 = vdwg.mxu0
    %495 = vmatprep.subr.bf16.mxu0 0
    %496 = vmatpush1.bf16.xpose.msra.mxu0 %v323
    %497 = vmatprep.subr.bf16.mxu0 0
    %498 = vmatpush1.bf16.xpose.msra.mxu0 %v320
    %499 = vmatprep.subr.bf16.mxu0 0
    %500 = vmatpush1.bf16.xpose.msra.mxu0 %v317
    %501 = vmatprep.subr.bf16.mxu0 0
    %502 = vmatpush1.bf16.xpose.msra.mxu0 %v314
    %503 = vmatprep.subr.bf16.mxu0 0
    %504 = vmatpush1.bf16.xpose.msra.mxu0 %v311
    %505 = vmatprep.subr.bf16.mxu0 0
    %506 = vmatpush1.bf16.xpose.msra.mxu0 %v308
    %507 = vmatprep.subr.bf16.mxu0 0
    %508 = vmatpush1.bf16.xpose.msra.mxu0 %v305
    %509 = vmatprep.subr.bf16.mxu0 0
    %510 = vmatpush1.bf16.xpose.msra.mxu0 %v302
    %511 = vmatprep.subr.bf16.mxu0 0
    %512 = vmatpush2.bf16.xpose.msra.mxu0 %v347
    %513 = vmatprep.subr.bf16.mxu0 0
    %514 = vmatpush2.bf16.xpose.msra.mxu0 %v344
    %515 = vmatprep.subr.bf16.mxu0 0
    %516 = vmatpush2.bf16.xpose.msra.mxu0 %v341
    %517 = vmatprep.subr.bf16.mxu0 0
    %518 = vmatpush2.bf16.xpose.msra.mxu0 %v338
    %519 = vmatprep.subr.bf16.mxu0 0
    %520 = vmatpush2.bf16.xpose.msra.mxu0 %v335
    %521 = vmatprep.subr.bf16.mxu0 0
    %522 = vmatpush2.bf16.xpose.msra.mxu0 %v332
    %523 = vmatprep.subr.bf16.mxu0 0
    %524 = vmatpush2.bf16.xpose.msra.mxu0 %v329
    %525 = vmatprep.subr.bf16.mxu0 0
    %526 = vmatpush2.bf16.xpose.msra.mxu0 %v326
    %527 = vmatprep.mubr.bf16.mxu0 0
    %528 = vmatmul.mubr.bf16.gmra.mxu0 %v248
    %v529 = vpop.f32.mrf.mxu0
    %v530 = vadd.f32 %v229, %v529
    %v531 = vpop.f32.mrf.mxu0
    %v532 = vadd.f32 %v229, %v531
    %v533 = vpop.f32.mrf.mxu0
    %v534 = vadd.f32 %v234, %v533
    %v535 = vpop.f32.mrf.mxu0
    %v536 = vadd.f32 %v234, %v535
    %537 = vmatprep.mubr.bf16.mxu0 0
    %538 = vmatmul.mubr.bf16.gmra.mxu0 %v251
    %v539 = vpop.f32.mrf.mxu0
    %v540 = vadd.f32 %v239, %v539
    %v541 = vpop.f32.mrf.mxu0
    %v542 = vadd.f32 %v239, %v541
    %v543 = vpop.f32.mrf.mxu0
    %v544 = vadd.f32 %v244, %v543
    %v545 = vpop.f32.mrf.mxu0
    %v546 = vadd.f32 %v244, %v545
    %547 = vdwg.mxu0
    %548 = vmatprep.subr.bf16.mxu0 0
    %549 = vmatpush1.bf16.xpose.msra.mxu0 %v371
    %550 = vmatprep.subr.bf16.mxu0 0
    %551 = vmatpush1.bf16.xpose.msra.mxu0 %v368
    %552 = vmatprep.subr.bf16.mxu0 0
    %553 = vmatpush1.bf16.xpose.msra.mxu0 %v365
    %554 = vmatprep.subr.bf16.mxu0 0
    %555 = vmatpush1.bf16.xpose.msra.mxu0 %v362
    %556 = vmatprep.subr.bf16.mxu0 0
    %557 = vmatpush1.bf16.xpose.msra.mxu0 %v359
    %558 = vmatprep.subr.bf16.mxu0 0
    %559 = vmatpush1.bf16.xpose.msra.mxu0 %v356
    %560 = vmatprep.subr.bf16.mxu0 0
    %561 = vmatpush1.bf16.xpose.msra.mxu0 %v353
    %562 = vmatprep.subr.bf16.mxu0 0
    %563 = vmatpush1.bf16.xpose.msra.mxu0 %v350
    %564 = vmatprep.subr.bf16.mxu0 0
    %565 = vmatpush2.bf16.xpose.msra.mxu0 %v395
    %566 = vmatprep.subr.bf16.mxu0 0
    %567 = vmatpush2.bf16.xpose.msra.mxu0 %v392
    %568 = vmatprep.subr.bf16.mxu0 0
    %569 = vmatpush2.bf16.xpose.msra.mxu0 %v389
    %570 = vmatprep.subr.bf16.mxu0 0
    %571 = vmatpush2.bf16.xpose.msra.mxu0 %v386
    %572 = vmatprep.subr.bf16.mxu0 0
    %573 = vmatpush2.bf16.xpose.msra.mxu0 %v383
    %574 = vmatprep.subr.bf16.mxu0 0
    %575 = vmatpush2.bf16.xpose.msra.mxu0 %v380
    %576 = vmatprep.subr.bf16.mxu0 0
    %577 = vmatpush2.bf16.xpose.msra.mxu0 %v377
    %578 = vmatprep.subr.bf16.mxu0 0
    %579 = vmatpush2.bf16.xpose.msra.mxu0 %v374
    %580 = vmatprep.mubr.bf16.mxu0 0
    %581 = vmatmul.mubr.bf16.gmra.mxu0 %v248
    %v582 = vpop.f32.mrf.mxu0
    %v583 = vadd.f32 %v229, %v582
    %v584 = vpop.f32.mrf.mxu0
    %v585 = vadd.f32 %v229, %v584
    %v586 = vpop.f32.mrf.mxu0
    %v587 = vadd.f32 %v234, %v586
    %v588 = vpop.f32.mrf.mxu0
    %v589 = vadd.f32 %v234, %v588
    %590 = vmatprep.mubr.bf16.mxu0 0
    %591 = vmatmul.mubr.bf16.gmra.mxu0 %v251
    %v592 = vpop.f32.mrf.mxu0
    %v593 = vadd.f32 %v239, %v592
    %v594 = vpop.f32.mrf.mxu0
    %v595 = vadd.f32 %v239, %v594
    %v596 = vpop.f32.mrf.mxu0
    %v597 = vadd.f32 %v244, %v596
    %v598 = vpop.f32.mrf.mxu0
    %v599 = vadd.f32 %v244, %v598
    %600 = vdwg.mxu0
    %601 = vmatprep.subr.bf16.mxu0 0
    %602 = vmatpush1.bf16.xpose.msra.mxu0 %v419
    %603 = vmatprep.subr.bf16.mxu0 0
    %604 = vmatpush1.bf16.xpose.msra.mxu0 %v416
    %605 = vmatprep.subr.bf16.mxu0 0
    %606 = vmatpush1.bf16.xpose.msra.mxu0 %v413
    %607 = vmatprep.subr.bf16.mxu0 0
    %608 = vmatpush1.bf16.xpose.msra.mxu0 %v410
    %609 = vmatprep.subr.bf16.mxu0 0
    %610 = vmatpush1.bf16.xpose.msra.mxu0 %v407
    %611 = vmatprep.subr.bf16.mxu0 0
    %612 = vmatpush1.bf16.xpose.msra.mxu0 %v404
    %613 = vmatprep.subr.bf16.mxu0 0
    %614 = vmatpush1.bf16.xpose.msra.mxu0 %v401
    %615 = vmatprep.subr.bf16.mxu0 0
    %616 = vmatpush1.bf16.xpose.msra.mxu0 %v398
    %617 = vmatprep.subr.bf16.mxu0 0
    %618 = vmatpush2.bf16.xpose.msra.mxu0 0
    %619 = vmatprep.subr.bf16.mxu0 0
    %620 = vmatpush2.bf16.xpose.msra.mxu0 %v440
    %621 = vmatprep.subr.bf16.mxu0 0
    %622 = vmatpush2.bf16.xpose.msra.mxu0 %v437
    %623 = vmatprep.subr.bf16.mxu0 0
    %624 = vmatpush2.bf16.xpose.msra.mxu0 %v434
    %625 = vmatprep.subr.bf16.mxu0 0
    %626 = vmatpush2.bf16.xpose.msra.mxu0 %v431
    %627 = vmatprep.subr.bf16.mxu0 0
    %628 = vmatpush2.bf16.xpose.msra.mxu0 %v428
    %629 = vmatprep.subr.bf16.mxu0 0
    %630 = vmatpush2.bf16.xpose.msra.mxu0 %v425
    %631 = vmatprep.subr.bf16.mxu0 0
    %632 = vmatpush2.bf16.xpose.msra.mxu0 %v422
    %633 = vmatprep.mubr.bf16.mxu0 0
    %634 = vmatmul.mubr.bf16.gmra.mxu0 %v248
    %v635 = vpop.f32.mrf.mxu0
    %v636 = vadd.f32 %v229, %v635
    %v637 = vpop.f32.mrf.mxu0
    %v638 = vadd.f32 %v229, %v637
    %v639 = vpop.f32.mrf.mxu0
    %v640 = vadd.f32 %v234, %v639
    %v641 = vpop.f32.mrf.mxu0
    %v642 = vadd.f32 %v234, %v641
    %643 = vmatprep.mubr.bf16.mxu0 0
    %644 = vmatmul.mubr.bf16.gmra.mxu0 %v251
    %v645 = vpop.f32.mrf.mxu0
    %v646 = vadd.f32 %v239, %v645
    %v647 = vpop.f32.mrf.mxu0
    %v648 = vadd.f32 %v239, %v647
    %v649 = vpop.f32.mrf.mxu0
    %v650 = vadd.f32 %v244, %v649
    %v651 = vpop.f32.mrf.mxu0
    %v652 = vadd.f32 %v244, %v651
    %653 = vdwg.mxu0
    %v654 = vmax.f32 %v477, 0.0
    %v655 = vmax.f32 %v479, 0.0
    %v656 = vmax.f32 %v530, 0.0
    %v657 = vmax.f32 %v532, 0.0
    %v658 = vmax.f32 %v583, 0.0
    %v659 = vmax.f32 %v585, 0.0
    %v660 = vmax.f32 %v636, 0.0
    %v661 = vmax.f32 %v638, 0.0
    %v662 = vmax.f32 %v481, 0.0
    %v663 = vmax.f32 %v483, 0.0
    %v664 = vmax.f32 %v534, 0.0
    %v665 = vmax.f32 %v536, 0.0
    %v666 = vmax.f32 %v587, 0.0
    %v667 = vmax.f32 %v589, 0.0
    %v668 = vmax.f32 %v640, 0.0
    %v669 = vmax.f32 %v642, 0.0
    %v670 = vmax.f32 %v487, 0.0
    %v671 = vmax.f32 %v489, 0.0
    %v672 = vmax.f32 %v540, 0.0
    %v673 = vmax.f32 %v542, 0.0
    %v674 = vmax.f32 %v593, 0.0
    %v675 = vmax.f32 %v595, 0.0
    %v676 = vmax.f32 %v646, 0.0
    %v677 = vmax.f32 %v648, 0.0
    %v678 = vmax.f32 %v491, 0.0
    %v679 = vmax.f32 %v493, 0.0
    %v680 = vmax.f32 %v544, 0.0
    %v681 = vmax.f32 %v546, 0.0
    %v682 = vmax.f32 %v597, 0.0
    %v683 = vmax.f32 %v599, 0.0
    %v684 = vmax.f32 %v650, 0.0
    %v685 = vmax.f32 %v652, 0.0
    %v686 = vld [vmem:[%s3] sm:$0xff]
    %v687 = vld [vmem:[%s3 + $0x8] sm:$0xff]
    %v688 = vld [vmem:[%s3 + $0x10] sm:$0xff]
    %v689 = vld [vmem:[%s3 + $0x18] sm:$0xff]
    %v690 = vpack.c.bf16 %v687, %v686
    %v691 = vpack.c.bf16 %v689, %v688
    %v692 = vld [vmem:[%s4] sm:$0xff]
    %v693 = vld [vmem:[%s4 + $0x8] sm:$0xff]
    %v694 = vld [vmem:[%s4 + $0x10] sm:$0xff]
    %v695 = vld [vmem:[%s4 + $0x18] sm:$0xff]
    %v696 = vpack.c.bf16 %v662, %v654
    %v697 = vpack.c.bf16 %v663, %v655
    %v698 = vpack.c.bf16 %v664, %v656
    %v699 = vpack.c.bf16 %v665, %v657
    %v700 = vpack.c.bf16 %v666, %v658
    %v701 = vpack.c.bf16 %v667, %v659
    %v702 = vpack.c.bf16 %v668, %v660
    %v703 = vpack.c.bf16 %v669, %v661
    %v704 = vpack.c.bf16 %v678, %v670
    %v705 = vpack.c.bf16 %v679, %v671
    %v706 = vpack.c.bf16 %v680, %v672
    %v707 = vpack.c.bf16 %v681, %v673
    %v708 = vpack.c.bf16 %v682, %v674
    %v709 = vpack.c.bf16 %v683, %v675
    %v710 = vpack.c.bf16 %v684, %v676
    %v711 = vpack.c.bf16 %v685, %v677
    %713 = vset.pattern.permute.xlu0 0
    %714 = vperm.xlu0 %713, %v692
    %v715 = vpop.permute.xlu0 %714
    %718 = vset.pattern.permute.xlu0 0
    %719 = vperm.xlu0 %718, %v693
    %v720 = vpop.permute.xlu0 %719
    %723 = vset.pattern.permute.xlu0 0
    %724 = vperm.xlu0 %723, %v694
    %v725 = vpop.permute.xlu0 %724
    %728 = vset.pattern.permute.xlu0 0
    %729 = vperm.xlu0 %728, %v695
    %v730 = vpop.permute.xlu0 %729
    %vm732 = vcmask 261120
    %v734 = vsel %vm732, %v690, 0
    %v737 = vsel %vm732, %v691, 0
    %739 = vmatprep.subr.bf16.mxu0 0
    %740 = vmatpush1.bf16.msra.mxu0 0
    %741 = vmatprep.subr.bf16.mxu0 0
    %742 = vmatpush1.bf16.msra.mxu0 0
    %743 = vmatprep.subr.bf16.mxu0 0
    %744 = vmatpush1.bf16.msra.mxu0 0
    %745 = vmatprep.subr.bf16.mxu0 0
    %746 = vmatpush1.bf16.msra.mxu0 0
    %747 = vmatprep.subr.bf16.mxu0 0
    %748 = vmatpush1.bf16.msra.mxu0 0
    %749 = vmatprep.subr.bf16.mxu0 0
    %750 = vmatpush1.bf16.msra.mxu0 0
    %751 = vmatprep.subr.bf16.mxu0 %v705
    %752 = vmatpush1.bf16.msra.mxu0 %v704
    %753 = vmatprep.subr.bf16.mxu0 %v697
    %754 = vmatpush1.bf16.msra.mxu0 %v696
    %755 = vmatprep.subr.bf16.mxu0 0
    %756 = vmatpush2.bf16.msra.mxu0 0
    %757 = vmatprep.subr.bf16.mxu0 0
    %758 = vmatpush2.bf16.msra.mxu0 0
    %759 = vmatprep.subr.bf16.mxu0 0
    %760 = vmatpush2.bf16.msra.mxu0 0
    %761 = vmatprep.subr.bf16.mxu0 0
    %762 = vmatpush2.bf16.msra.mxu0 0
    %763 = vmatprep.subr.bf16.mxu0 0
    %764 = vmatpush2.bf16.msra.mxu0 0
    %765 = vmatprep.subr.bf16.mxu0 0
    %766 = vmatpush2.bf16.msra.mxu0 0
    %767 = vmatprep.subr.bf16.mxu0 0
    %768 = vmatpush2.bf16.msra.mxu0 0
    %769 = vmatprep.subr.bf16.mxu0 0
    %770 = vmatpush2.bf16.msra.mxu0 0
    %771 = vmatprep.mubr.bf16.mxu0 0
    %772 = vmatmul.mubr.bf16.gmra.mxu0 %v734
    %v773 = vpop.f32.mrf.mxu0
    %v774 = vadd.f32 %v715, %v773
    %v775 = vpop.f32.mrf.mxu0
    %v776 = vadd.f32 %v715, %v775
    %v777 = vpop.f32.mrf.mxu0
    %v778 = vadd.f32 %v720, %v777
    %v779 = vpop.f32.mrf.mxu0
    %v780 = vadd.f32 %v720, %v779
    %781 = vmatprep.mubr.bf16.mxu0 0
    %782 = vmatmul.mubr.bf16.gmra.mxu0 %v737
    %v783 = vpop.f32.mrf.mxu0
    %v784 = vadd.f32 %v725, %v783
    %v785 = vpop.f32.mrf.mxu0
    %v786 = vadd.f32 %v725, %v785
    %v787 = vpop.f32.mrf.mxu0
    %v788 = vadd.f32 %v730, %v787
    %v789 = vpop.f32.mrf.mxu0
    %v790 = vadd.f32 %v730, %v789
    %791 = vdwg.mxu0
    %792 = vmatprep.subr.bf16.mxu0 0
    %793 = vmatpush1.bf16.msra.mxu0 0
    %794 = vmatprep.subr.bf16.mxu0 0
    %795 = vmatpush1.bf16.msra.mxu0 0
    %796 = vmatprep.subr.bf16.mxu0 0
    %797 = vmatpush1.bf16.msra.mxu0 0
    %798 = vmatprep.subr.bf16.mxu0 0
    %799 = vmatpush1.bf16.msra.mxu0 0
    %800 = vmatprep.subr.bf16.mxu0 0
    %801 = vmatpush1.bf16.msra.mxu0 0
    %802 = vmatprep.subr.bf16.mxu0 0
    %803 = vmatpush1.bf16.msra.mxu0 0
    %804 = vmatprep.subr.bf16.mxu0 %v707
    %805 = vmatpush1.bf16.msra.mxu0 %v706
    %806 = vmatprep.subr.bf16.mxu0 %v699
    %807 = vmatpush1.bf16.msra.mxu0 %v698
    %808 = vmatprep.subr.bf16.mxu0 0
    %809 = vmatpush2.bf16.msra.mxu0 0
    %810 = vmatprep.subr.bf16.mxu0 0
    %811 = vmatpush2.bf16.msra.mxu0 0
    %812 = vmatprep.subr.bf16.mxu0 0
    %813 = vmatpush2.bf16.msra.mxu0 0
    %814 = vmatprep.subr.bf16.mxu0 0
    %815 = vmatpush2.bf16.msra.mxu0 0
    %816 = vmatprep.subr.bf16.mxu0 0
    %817 = vmatpush2.bf16.msra.mxu0 0
    %818 = vmatprep.subr.bf16.mxu0 0
    %819 = vmatpush2.bf16.msra.mxu0 0
    %820 = vmatprep.subr.bf16.mxu0 0
    %821 = vmatpush2.bf16.msra.mxu0 0
    %822 = vmatprep.subr.bf16.mxu0 0
    %823 = vmatpush2.bf16.msra.mxu0 0
    %824 = vmatprep.mubr.bf16.mxu0 0
    %825 = vmatmul.mubr.bf16.gmra.mxu0 %v734
    %v826 = vpop.f32.mrf.mxu0
    %v827 = vadd.f32 %v715, %v826
    %v828 = vpop.f32.mrf.mxu0
    %v829 = vadd.f32 %v715, %v828
    %v830 = vpop.f32.mrf.mxu0
    %v831 = vadd.f32 %v720, %v830
    %v832 = vpop.f32.mrf.mxu0
    %v833 = vadd.f32 %v720, %v832
    %834 = vmatprep.mubr.bf16.mxu0 0
    %835 = vmatmul.mubr.bf16.gmra.mxu0 %v737
    %v836 = vpop.f32.mrf.mxu0
    %v837 = vadd.f32 %v725, %v836
    %v838 = vpop.f32.mrf.mxu0
    %v839 = vadd.f32 %v725, %v838
    %v840 = vpop.f32.mrf.mxu0
    %v841 = vadd.f32 %v730, %v840
    %v842 = vpop.f32.mrf.mxu0
    %v843 = vadd.f32 %v730, %v842
    %844 = vdwg.mxu0
    %845 = vmatprep.subr.bf16.mxu0 0
    %846 = vmatpush1.bf16.msra.mxu0 0
    %847 = vmatprep.subr.bf16.mxu0 0
    %848 = vmatpush1.bf16.msra.mxu0 0
    %849 = vmatprep.subr.bf16.mxu0 0
    %850 = vmatpush1.bf16.msra.mxu0 0
    %851 = vmatprep.subr.bf16.mxu0 0
    %852 = vmatpush1.bf16.msra.mxu0 0
    %853 = vmatprep.subr.bf16.mxu0 0
    %854 = vmatpush1.bf16.msra.mxu0 0
    %855 = vmatprep.subr.bf16.mxu0 0
    %856 = vmatpush1.bf16.msra.mxu0 0
    %857 = vmatprep.subr.bf16.mxu0 %v709
    %858 = vmatpush1.bf16.msra.mxu0 %v708
    %859 = vmatprep.subr.bf16.mxu0 %v701
    %860 = vmatpush1.bf16.msra.mxu0 %v700
    %861 = vmatprep.subr.bf16.mxu0 0
    %862 = vmatpush2.bf16.msra.mxu0 0
    %863 = vmatprep.subr.bf16.mxu0 0
    %864 = vmatpush2.bf16.msra.mxu0 0
    %865 = vmatprep.subr.bf16.mxu0 0
    %866 = vmatpush2.bf16.msra.mxu0 0
    %867 = vmatprep.subr.bf16.mxu0 0
    %868 = vmatpush2.bf16.msra.mxu0 0
    %869 = vmatprep.subr.bf16.mxu0 0
    %870 = vmatpush2.bf16.msra.mxu0 0
    %871 = vmatprep.subr.bf16.mxu0 0
    %872 = vmatpush2.bf16.msra.mxu0 0
    %873 = vmatprep.subr.bf16.mxu0 0
    %874 = vmatpush2.bf16.msra.mxu0 0
    %875 = vmatprep.subr.bf16.mxu0 0
    %876 = vmatpush2.bf16.msra.mxu0 0
    %877 = vmatprep.mubr.bf16.mxu0 0
    %878 = vmatmul.mubr.bf16.gmra.mxu0 %v734
    %v879 = vpop.f32.mrf.mxu0
    %v880 = vadd.f32 %v715, %v879
    %v881 = vpop.f32.mrf.mxu0
    %v882 = vadd.f32 %v715, %v881
    %v883 = vpop.f32.mrf.mxu0
    %v884 = vadd.f32 %v720, %v883
    %v885 = vpop.f32.mrf.mxu0
    %v886 = vadd.f32 %v720, %v885
    %887 = vmatprep.mubr.bf16.mxu0 0
    %888 = vmatmul.mubr.bf16.gmra.mxu0 %v737
    %v889 = vpop.f32.mrf.mxu0
    %v890 = vadd.f32 %v725, %v889
    %v891 = vpop.f32.mrf.mxu0
    %v892 = vadd.f32 %v725, %v891
    %v893 = vpop.f32.mrf.mxu0
    %v894 = vadd.f32 %v730, %v893
    %v895 = vpop.f32.mrf.mxu0
    %v896 = vadd.f32 %v730, %v895
    %897 = vdwg.mxu0
    %898 = vmatprep.subr.bf16.mxu0 0
    %899 = vmatpush1.bf16.msra.mxu0 0
    %900 = vmatprep.subr.bf16.mxu0 0
    %901 = vmatpush1.bf16.msra.mxu0 0
    %902 = vmatprep.subr.bf16.mxu0 0
    %903 = vmatpush1.bf16.msra.mxu0 0
    %904 = vmatprep.subr.bf16.mxu0 0
    %905 = vmatpush1.bf16.msra.mxu0 0
    %906 = vmatprep.subr.bf16.mxu0 0
    %907 = vmatpush1.bf16.msra.mxu0 0
    %908 = vmatprep.subr.bf16.mxu0 0
    %909 = vmatpush1.bf16.msra.mxu0 0
    %910 = vmatprep.subr.bf16.mxu0 %v711
    %911 = vmatpush1.bf16.msra.mxu0 %v710
    %912 = vmatprep.subr.bf16.mxu0 %v703
    %913 = vmatpush1.bf16.msra.mxu0 %v702
    %914 = vmatprep.subr.bf16.mxu0 0
    %915 = vmatpush2.bf16.msra.mxu0 0
    %916 = vmatprep.subr.bf16.mxu0 0
    %917 = vmatpush2.bf16.msra.mxu0 0
    %918 = vmatprep.subr.bf16.mxu0 0
    %919 = vmatpush2.bf16.msra.mxu0 0
    %920 = vmatprep.subr.bf16.mxu0 0
    %921 = vmatpush2.bf16.msra.mxu0 0
    %922 = vmatprep.subr.bf16.mxu0 0
    %923 = vmatpush2.bf16.msra.mxu0 0
    %924 = vmatprep.subr.bf16.mxu0 0
    %925 = vmatpush2.bf16.msra.mxu0 0
    %926 = vmatprep.subr.bf16.mxu0 0
    %927 = vmatpush2.bf16.msra.mxu0 0
    %928 = vmatprep.subr.bf16.mxu0 0
    %929 = vmatpush2.bf16.msra.mxu0 0
    %930 = vmatprep.mubr.bf16.mxu0 0
    %931 = vmatmul.mubr.bf16.gmra.mxu0 %v734
    %v932 = vpop.f32.mrf.mxu0
    %v933 = vadd.f32 %v715, %v932
    %v934 = vpop.f32.mrf.mxu0
    %v935 = vadd.f32 %v715, %v934
    %v936 = vpop.f32.mrf.mxu0
    %v937 = vadd.f32 %v720, %v936
    %v938 = vpop.f32.mrf.mxu0
    %v939 = vadd.f32 %v720, %v938
    %940 = vmatprep.mubr.bf16.mxu0 0
    %941 = vmatmul.mubr.bf16.gmra.mxu0 %v737
    %v942 = vpop.f32.mrf.mxu0
    %v943 = vadd.f32 %v725, %v942
    %v944 = vpop.f32.mrf.mxu0
    %v945 = vadd.f32 %v725, %v944
    %v946 = vpop.f32.mrf.mxu0
    %v947 = vadd.f32 %v730, %v946
    %v948 = vpop.f32.mrf.mxu0
    %v949 = vadd.f32 %v730, %v948
    %950 = vdwg.mxu0
    %v951 = vmax.f32 %v774, 0.0
    %v952 = vmax.f32 %v776, 0.0
    %v953 = vmax.f32 %v827, 0.0
    %v954 = vmax.f32 %v829, 0.0
    %v955 = vmax.f32 %v880, 0.0
    %v956 = vmax.f32 %v882, 0.0
    %v957 = vmax.f32 %v933, 0.0
    %v958 = vmax.f32 %v935, 0.0
    %v959 = vmax.f32 %v778, 0.0
    %v960 = vmax.f32 %v780, 0.0
    %v961 = vmax.f32 %v831, 0.0
    %v962 = vmax.f32 %v833, 0.0
    %v963 = vmax.f32 %v884, 0.0
    %v964 = vmax.f32 %v886, 0.0
    %v965 = vmax.f32 %v937, 0.0
    %v966 = vmax.f32 %v939, 0.0
    %v967 = vmax.f32 %v784, 0.0
    %v968 = vmax.f32 %v786, 0.0
    %v969 = vmax.f32 %v837, 0.0
    %v970 = vmax.f32 %v839, 0.0
    %v971 = vmax.f32 %v890, 0.0
    %v972 = vmax.f32 %v892, 0.0
    %v973 = vmax.f32 %v943, 0.0
    %v974 = vmax.f32 %v945, 0.0
    %v975 = vmax.f32 %v788, 0.0
    %v976 = vmax.f32 %v790, 0.0
    %v977 = vmax.f32 %v841, 0.0
    %v978 = vmax.f32 %v843, 0.0
    %v979 = vmax.f32 %v894, 0.0
    %v980 = vmax.f32 %v896, 0.0
    %v981 = vmax.f32 %v947, 0.0
    %v982 = vmax.f32 %v949, 0.0
    %v983 = vld [vmem:[%s5] sm:$0xf]
    %v984 = vpack.c.bf16 %v983, %v983
    %v985 = vld [vmem:[%s6] sm:$0xf]
    %v986 = vpack.c.bf16 %v959, %v951
    %v987 = vpack.c.bf16 %v960, %v952
    %v988 = vpack.c.bf16 %v961, %v953
    %v989 = vpack.c.bf16 %v962, %v954
    %v990 = vpack.c.bf16 %v963, %v955
    %v991 = vpack.c.bf16 %v964, %v956
    %v992 = vpack.c.bf16 %v965, %v957
    %v993 = vpack.c.bf16 %v966, %v958
    %v994 = vpack.c.bf16 %v975, %v967
    %v995 = vpack.c.bf16 %v976, %v968
    %v996 = vpack.c.bf16 %v977, %v969
    %v997 = vpack.c.bf16 %v978, %v970
    %v998 = vpack.c.bf16 %v979, %v971
    %v999 = vpack.c.bf16 %v980, %v972
    %v1000 = vpack.c.bf16 %v981, %v973
    %v1001 = vpack.c.bf16 %v982, %v974
    %1003 = vset.pattern.permute.xlu0 0
    %1004 = vperm.xlu0 %1003, %v985
    %v1005 = vpop.permute.xlu0 %1004
    %v1008 = vsel %vm732, %v984, 0
    %1010 = vmatprep.subr.bf16.mxu0 0
    %1011 = vmatpush1.bf16.msra.mxu0 0
    %1012 = vmatprep.subr.bf16.mxu0 0
    %1013 = vmatpush1.bf16.msra.mxu0 0
    %1014 = vmatprep.subr.bf16.mxu0 0
    %1015 = vmatpush1.bf16.msra.mxu0 0
    %1016 = vmatprep.subr.bf16.mxu0 0
    %1017 = vmatpush1.bf16.msra.mxu0 0
    %1018 = vmatprep.subr.bf16.mxu0 0
    %1019 = vmatpush1.bf16.msra.mxu0 0
    %1020 = vmatprep.subr.bf16.mxu0 0
    %1021 = vmatpush1.bf16.msra.mxu0 0
    %1022 = vmatprep.subr.bf16.mxu0 %v995
    %1023 = vmatpush1.bf16.msra.mxu0 %v994
    %1024 = vmatprep.subr.bf16.mxu0 %v987
    %1025 = vmatpush1.bf16.msra.mxu0 %v986
    %1026 = vmatprep.subr.bf16.mxu0 0
    %1027 = vmatpush2.bf16.msra.mxu0 0
    %1028 = vmatprep.subr.bf16.mxu0 0
    %1029 = vmatpush2.bf16.msra.mxu0 0
    %1030 = vmatprep.subr.bf16.mxu0 0
    %1031 = vmatpush2.bf16.msra.mxu0 0
    %1032 = vmatprep.subr.bf16.mxu0 0
    %1033 = vmatpush2.bf16.msra.mxu0 0
    %1034 = vmatprep.subr.bf16.mxu0 0
    %1035 = vmatpush2.bf16.msra.mxu0 0
    %1036 = vmatprep.subr.bf16.mxu0 0
    %1037 = vmatpush2.bf16.msra.mxu0 0
    %1038 = vmatprep.subr.bf16.mxu0 0
    %1039 = vmatpush2.bf16.msra.mxu0 0
    %1040 = vmatprep.subr.bf16.mxu0 0
    %1041 = vmatpush2.bf16.msra.mxu0 0
    %1042 = vmatprep.mubr.bf16.mxu0 0
    %1043 = vmatmul.mubr.bf16.gmra.mxu0 %v1008
    %v1044 = vpop.f32.mrf.mxu0
    %v1045 = vadd.f32 %v1005, %v1044
    %v1046 = vpop.f32.mrf.mxu0
    %v1047 = vadd.f32 %v1005, %v1046
    %v1048 = vpop.f32.mrf.mxu0
    %v1049 = vpop.f32.mrf.mxu0
    %1050 = vdwg.mxu0
    %1051 = vmatprep.subr.bf16.mxu0 0
    %1052 = vmatpush1.bf16.msra.mxu0 0
    %1053 = vmatprep.subr.bf16.mxu0 0
    %1054 = vmatpush1.bf16.msra.mxu0 0
    %1055 = vmatprep.subr.bf16.mxu0 0
    %1056 = vmatpush1.bf16.msra.mxu0 0
    %1057 = vmatprep.subr.bf16.mxu0 0
    %1058 = vmatpush1.bf16.msra.mxu0 0
    %1059 = vmatprep.subr.bf16.mxu0 0
    %1060 = vmatpush1.bf16.msra.mxu0 0
    %1061 = vmatprep.subr.bf16.mxu0 0
    %1062 = vmatpush1.bf16.msra.mxu0 0
    %1063 = vmatprep.subr.bf16.mxu0 %v997
    %1064 = vmatpush1.bf16.msra.mxu0 %v996
    %1065 = vmatprep.subr.bf16.mxu0 %v989
    %1066 = vmatpush1.bf16.msra.mxu0 %v988
    %1067 = vmatprep.subr.bf16.mxu0 0
    %1068 = vmatpush2.bf16.msra.mxu0 0
    %1069 = vmatprep.subr.bf16.mxu0 0
    %1070 = vmatpush2.bf16.msra.mxu0 0
    %1071 = vmatprep.subr.bf16.mxu0 0
    %1072 = vmatpush2.bf16.msra.mxu0 0
    %1073 = vmatprep.subr.bf16.mxu0 0
    %1074 = vmatpush2.bf16.msra.mxu0 0
    %1075 = vmatprep.subr.bf16.mxu0 0
    %1076 = vmatpush2.bf16.msra.mxu0 0
    %1077 = vmatprep.subr.bf16.mxu0 0
    %1078 = vmatpush2.bf16.msra.mxu0 0
    %1079 = vmatprep.subr.bf16.mxu0 0
    %1080 = vmatpush2.bf16.msra.mxu0 0
    %1081 = vmatprep.subr.bf16.mxu0 0
    %1082 = vmatpush2.bf16.msra.mxu0 0
    %1083 = vmatprep.mubr.bf16.mxu0 0
    %1084 = vmatmul.mubr.bf16.gmra.mxu0 %v1008
    %v1085 = vpop.f32.mrf.mxu0
    %v1086 = vadd.f32 %v1005, %v1085
    %v1087 = vpop.f32.mrf.mxu0
    %v1088 = vadd.f32 %v1005, %v1087
    %v1089 = vpop.f32.mrf.mxu0
    %v1090 = vpop.f32.mrf.mxu0
    %1091 = vdwg.mxu0
    %1092 = vmatprep.subr.bf16.mxu0 0
    %1093 = vmatpush1.bf16.msra.mxu0 0
    %1094 = vmatprep.subr.bf16.mxu0 0
    %1095 = vmatpush1.bf16.msra.mxu0 0
    %1096 = vmatprep.subr.bf16.mxu0 0
    %1097 = vmatpush1.bf16.msra.mxu0 0
    %1098 = vmatprep.subr.bf16.mxu0 0
    %1099 = vmatpush1.bf16.msra.mxu0 0
    %1100 = vmatprep.subr.bf16.mxu0 0
    %1101 = vmatpush1.bf16.msra.mxu0 0
    %1102 = vmatprep.subr.bf16.mxu0 0
    %1103 = vmatpush1.bf16.msra.mxu0 0
    %1104 = vmatprep.subr.bf16.mxu0 %v999
    %1105 = vmatpush1.bf16.msra.mxu0 %v998
    %1106 = vmatprep.subr.bf16.mxu0 %v991
    %1107 = vmatpush1.bf16.msra.mxu0 %v990
    %1108 = vmatprep.subr.bf16.mxu0 0
    %1109 = vmatpush2.bf16.msra.mxu0 0
    %1110 = vmatprep.subr.bf16.mxu0 0
    %1111 = vmatpush2.bf16.msra.mxu0 0
    %1112 = vmatprep.subr.bf16.mxu0 0
    %1113 = vmatpush2.bf16.msra.mxu0 0
    %1114 = vmatprep.subr.bf16.mxu0 0
    %1115 = vmatpush2.bf16.msra.mxu0 0
    %1116 = vmatprep.subr.bf16.mxu0 0
    %1117 = vmatpush2.bf16.msra.mxu0 0
    %1118 = vmatprep.subr.bf16.mxu0 0
    %1119 = vmatpush2.bf16.msra.mxu0 0
    %1120 = vmatprep.subr.bf16.mxu0 0
    %1121 = vmatpush2.bf16.msra.mxu0 0
    %1122 = vmatprep.subr.bf16.mxu0 0
    %1123 = vmatpush2.bf16.msra.mxu0 0
    %1124 = vmatprep.mubr.bf16.mxu0 0
    %1125 = vmatmul.mubr.bf16.gmra.mxu0 %v1008
    %v1126 = vpop.f32.mrf.mxu0
    %v1127 = vadd.f32 %v1005, %v1126
    %v1128 = vpop.f32.mrf.mxu0
    %v1129 = vadd.f32 %v1005, %v1128
    %v1130 = vpop.f32.mrf.mxu0
    %v1131 = vpop.f32.mrf.mxu0
    %1132 = vdwg.mxu0
    %1133 = vmatprep.subr.bf16.mxu0 0
    %1134 = vmatpush1.bf16.msra.mxu0 0
    %1135 = vmatprep.subr.bf16.mxu0 0
    %1136 = vmatpush1.bf16.msra.mxu0 0
    %1137 = vmatprep.subr.bf16.mxu0 0
    %1138 = vmatpush1.bf16.msra.mxu0 0
    %1139 = vmatprep.subr.bf16.mxu0 0
    %1140 = vmatpush1.bf16.msra.mxu0 0
    %1141 = vmatprep.subr.bf16.mxu0 0
    %1142 = vmatpush1.bf16.msra.mxu0 0
    %1143 = vmatprep.subr.bf16.mxu0 0
    %1144 = vmatpush1.bf16.msra.mxu0 0
    %1145 = vmatprep.subr.bf16.mxu0 %v1001
    %1146 = vmatpush1.bf16.msra.mxu0 %v1000
    %1147 = vmatprep.subr.bf16.mxu0 %v993
    %1148 = vmatpush1.bf16.msra.mxu0 %v992
    %1149 = vmatprep.subr.bf16.mxu0 0
    %1150 = vmatpush2.bf16.msra.mxu0 0
    %1151 = vmatprep.subr.bf16.mxu0 0
    %1152 = vmatpush2.bf16.msra.mxu0 0
    %1153 = vmatprep.subr.bf16.mxu0 0
    %1154 = vmatpush2.bf16.msra.mxu0 0
    %1155 = vmatprep.subr.bf16.mxu0 0
    %1156 = vmatpush2.bf16.msra.mxu0 0
    %1157 = vmatprep.subr.bf16.mxu0 0
    %1158 = vmatpush2.bf16.msra.mxu0 0
    %1159 = vmatprep.subr.bf16.mxu0 0
    %1160 = vmatpush2.bf16.msra.mxu0 0
    %1161 = vmatprep.subr.bf16.mxu0 0
    %1162 = vmatpush2.bf16.msra.mxu0 0
    %1163 = vmatprep.subr.bf16.mxu0 0
    %1164 = vmatpush2.bf16.msra.mxu0 0
    %1165 = vmatprep.mubr.bf16.mxu0 0
    %1166 = vmatmul.mubr.bf16.gmra.mxu0 %v1008
    %v1167 = vpop.f32.mrf.mxu0
    %v1168 = vadd.f32 %v1005, %v1167
    %v1169 = vpop.f32.mrf.mxu0
    %v1170 = vadd.f32 %v1005, %v1169
    %v1171 = vpop.f32.mrf.mxu0
    %v1172 = vpop.f32.mrf.mxu0
    %1173 = vdwg.mxu0
    %v1174 = vmax.f32 %v1045, 0.0
    %v1175 = vmax.f32 %v1047, 0.0
    %v1176 = vmax.f32 %v1086, 0.0
    %v1177 = vmax.f32 %v1088, 0.0
    %v1178 = vmax.f32 %v1127, 0.0
    %v1179 = vmax.f32 %v1129, 0.0
    %v1180 = vmax.f32 %v1168, 0.0
    %v1181 = vmax.f32 %v1170, 0.0
    %v1190 = vcombine.low %v1174, %v1175
    %v1191 = vcombine.low %v1176, %v1177
    %v1192 = vcombine.low %v1178, %v1179
    %v1193 = vcombine.low %v1180, %v1181
    %1198 = vst [vmem:[#allocation2] sm:$0xff] %v1190
    %1199 = vst [vmem:[#allocation2 + $0x8] sm:$0xff] %v1191
    %1200 = vst [vmem:[#allocation2 + $0x10] sm:$0xff] %v1192
    %vm1201 = vcmask 1043456
    %vm1202 = vcmask 850948
    %vm1203 = vmor %vm1202, %vm1201
    %1204 = vst.msk [vmem:[#allocation2 + $0x18] sm:$0xff] %vm1203, %v1193
    // Predicated region
    $region30: #{tpu_custom_call.1} parent=1 // pred_check
      _
    $region31: #{tpu_custom_call.1} parent=1 // pred_check_branch
      %1206 = sbr.rel (0) target = $region33
    $region32: #{tpu_custom_call.1} parent=1 // pred_region
      %s1208 = ssub.s32 512, 512
      %1209 = vsyncadd [#allocation3], %s1208
      %s1211 = sshll.u32 [#allocation2], 4
      %s1212 = int_to_ptr.vmem [resolvable:$true] %s1211
      %1214 = dma.vmem_to_hbm [thread:$0]  %s1212, 512, %s7, [#allocation3]
    $region33: #{tpu_custom_call.1} parent=1 // pred_fallthru
      _
    // Predicated region
    $region34: #{tpu_custom_call.1} parent=1 // pred_check
      _
    $region35: #{tpu_custom_call.1} parent=1 // pred_check_branch
      %1216 = sbr.rel (0) target = $region37
    $region36: #{tpu_custom_call.1} parent=1 // pred_region
      %1217 = dma.done [#allocation3], 512
    $region37: #{tpu_custom_call.1} parent=1 // pred_fallthru
      _
    %1218 = vsyncpa [#allocation3], 1

</llo_original>
